<compile_context>
chip_gen: v5e
topology: v5e:2x2
jax: 0.10.0
libtpu: 0.0.40
codegen_flags: <defaults>
</compile_context>

<pallas_src>
import jax
import jax.numpy as jnp
from jax import lax
from jax.experimental import pallas as pl
from jax.experimental.pallas import tpu as pltpu


def _round_up(a, b):
    return -(-a // b) * b


def _channel_tiling(c2):
    """Pick (padded c2, channel tile TC) so output blocks are lane-dense."""
    if c2 <= 128:
        return c2, c2                  # single (lane-padded) tile
    if c2 % 128 == 0:
        return c2, 128                 # lane-dense 128-channel tiles
    return _round_up(c2, 128), 128     # pad channels with zeros, slice output


def _vmem_limit_bytes():
    # Raise the scoped-VMEM cap (defaults 16 MiB v5e / 32 MiB v6e,v7x) so the
    # whole-image blocks double-buffer; stay at 3/4 of physical so we never
    # exceed v7x's 64 MiB.
    try:
        return int(pltpu.get_tpu_info().vmem_capacity_bytes * 3 // 4)
    except Exception:
        return 48 * 1024 * 1024


def _make_scdown_kernel(k, s, p, H, W, Ho, Wo, Hp, Wp):
    """Fused cv1 (1x1 conv + BN) -> cv2 (depthwise kxk/s conv + BN) kernel."""

    def kernel(w1_ref, b1_ref, w2_ref, b2_ref, x_ref, o_ref, y1_scr):
        TC = o_ref.shape[-1]

        # ---------------- cv1: pointwise matmul on the MXU -----------------
        # x_ref[0]: (Hp*Wp, c1) zero-padded image rows, channels on lanes.
        y = jnp.dot(x_ref[0], w1_ref[...], preferred_element_type=jnp.float32)
        y = y.reshape(Hp, Wp, TC)                       # Wp is 8-aligned
        row = lax.broadcasted_iota(jnp.int32, (Hp, Wp, 1), 0)
        col = lax.broadcasted_iota(jnp.int32, (Hp, Wp, 1), 1)
        interior = ((row >= p) & (row < p + H) &
                    (col >= p) & (col < p + W)).astype(jnp.float32)
        # Matmul over the zero halo is already 0; only the bias needs masking
        # so the depthwise input is exactly zero-padded.
        y1_scr[...] = y + interior * b1_ref[...].reshape(1, 1, TC)

        # ------------- cv2: depthwise k x k, stride s, on the VPU ----------
        w2 = w2_ref[...]                                # (k*k, TC)
        b2 = b2_ref[...]                                # (1, TC)
        taps = [w2[i:i + 1, :] for i in range(k * k)]   # hoisted (1, TC) taps

        def row_body(oh, carry):
            # (Wo, TC) accumulator lives in vregs; one lane-dense store / row.
            acc = jnp.zeros((Wo, TC), jnp.float32)
            for kh in range(k):                         # static unroll: k*k taps
                for kw in range(k):
                    r = oh * s + kh
                    patch = y1_scr[r, pl.ds(kw, Wo, stride=s), :]   # (Wo, TC)
                    acc = acc + patch * taps[kh * k + kw]
            o_ref[0, oh, :, :] = (acc + b2).astype(o_ref.dtype)
            return carry

        lax.fori_loop(0, Ho, row_body, 0)

    return kernel


def fold_bn(conv_w, gamma, beta, mean, var, eps=1e-5):
    """Fold eval-mode BatchNorm into conv: returns (scaled_weight, bias)."""
    scale = gamma / jnp.sqrt(var + eps)
    w = conv_w * scale[:, None, None, None]
    b = beta - mean * scale
    return w, b


def scdown_forward(x_nchw, w1_eff, b1_eff, w2_eff, b2_eff, *, k, s):
    """SCDown forward (deploy semantics, BN already folded).

    x_nchw : (B, c1, H, W) float32
    w1_eff : (c1, c2)    folded pointwise weight (in, out)
    b1_eff : (c2,)       folded pointwise bias
    w2_eff : (k*k, c2)   folded depthwise taps (tap, channel)
    b2_eff : (c2,)       folded depthwise bias
    returns (B, c2, Ho, Wo) float32
    """
    B, c1, H, W = x_nchw.shape
    c2 = w1_eff.shape[1]
    p = (k - 1) // 2
    Ho = (H + 2 * p - k) // s + 1
    Wo = (W + 2 * p - k) // s + 1
    Hp = H + 2 * p
    Wp = _round_up(W + 2 * p, 8)       # extra right pad -> free sublane reshape

    c2p, TC = _channel_tiling(c2)
    if c2p != c2:
        w1_eff = jnp.pad(w1_eff, ((0, 0), (0, c2p - c2)))
        b1_eff = jnp.pad(b1_eff, (0, c2p - c2))
        w2_eff = jnp.pad(w2_eff, ((0, 0), (0, c2p - c2)))
        b2_eff = jnp.pad(b2_eff, (0, c2p - c2))

    # NCHW -> NHWC (channels on lanes) + zero pad for the depthwise halo.
    # TODO(synk): drop the NCHW<->NHWC transposes if the surrounding model can
    # be kept channels-last end to end.
    x_nhwc = jnp.transpose(x_nchw, (0, 2, 3, 1)).astype(jnp.float32)
    x_pad = jnp.pad(x_nhwc, ((0, 0), (p, p), (p, Wp - W - p), (0, 0)))
    x_flat = x_pad.reshape(B, Hp * Wp, c1)

    kernel = _make_scdown_kernel(k, s, p, H, W, Ho, Wo, Hp, Wp)

    # TODO(synk): for very large feature maps (e.g. 160x160 on v7x's 64 MiB
    # VMEM) add an H-tile grid axis with a (k - s)-row halo instead of
    # whole-image blocks.
    y2 = pl.pallas_call(
        kernel,
        out_shape=jax.ShapeDtypeStruct((B, Ho, Wo, c2p), jnp.float32),
        grid_spec=pltpu.PrefetchScalarGridSpec(
            num_scalar_prefetch=0,
            grid=(B, c2p // TC),
            in_specs=[
                pl.BlockSpec((c1, TC), lambda b, c: (0, c)),          # w1
                pl.BlockSpec((1, TC), lambda b, c: (0, c)),           # b1
                pl.BlockSpec((k * k, TC), lambda b, c: (0, c)),       # w2
                pl.BlockSpec((1, TC), lambda b, c: (0, c)),           # b2
                pl.BlockSpec((1, Hp * Wp, c1), lambda b, c: (b, 0, 0)),
            ],
            out_specs=pl.BlockSpec((1, Ho, Wo, TC), lambda b, c: (b, 0, 0, c)),
            scratch_shapes=[pltpu.VMEM((Hp, Wp, TC), jnp.float32)],
        ),
        compiler_params=pltpu.CompilerParams(
            dimension_semantics=("parallel", "parallel"),
            vmem_limit_bytes=_vmem_limit_bytes(),
        ),
    )(w1_eff, b1_eff.reshape(1, c2p), w2_eff, b2_eff.reshape(1, c2p), x_flat)

    if c2p != c2:
        y2 = y2[..., :c2]
    return jnp.transpose(y2, (0, 3, 1, 2))               # back to NCHW


def _reference(x, w1f, b1f, w2f, b2f, k, s):
    """Pure-XLA reference: conv1x1+bias, then depthwise conv+bias (NCHW)."""
    y = lax.conv_general_dilated(x, w1f, (1, 1), 'VALID',
                                 dimension_numbers=('NCHW', 'OIHW', 'NCHW'))
    y = y + b1f[None, :, None, None]
    p = (k - 1) // 2
    c2 = w2f.shape[0]
    z = lax.conv_general_dilated(y, w2f, (s, s), ((p, p), (p, p)),
                                 dimension_numbers=('NCHW', 'OIHW', 'NCHW'),
                                 feature_group_count=c2)
    return z + b2f[None, :, None, None]


if __name__ == "__main__":
    key = jax.random.PRNGKey(0)
    ks = jax.random.split(key, 11)

    # Small deterministic config consistent with SCDown(c1, c2, k, s).
    B, c1, c2, H, W = 2, 4, 8, 16, 16
    k_sz, stride = 3, 2

    x = jax.random.normal(ks[0], (B, c1, H, W), jnp.float32)

    # cv1: Conv2d(c1, c2, 1, bias=False) + BatchNorm2d(c2)   (eval-mode stats)
    w1_conv = jax.random.normal(ks[1], (c2, c1, 1, 1), jnp.float32) * 0.3
    g1 = jax.random.uniform(ks[2], (c2,), jnp.float32, minval=0.5, maxval=1.5)
    be1 = jax.random.normal(ks[3], (c2,), jnp.float32) * 0.1
    mu1 = jax.random.normal(ks[4], (c2,), jnp.float32) * 0.1
    var1 = jax.random.uniform(ks[5], (c2,), jnp.float32, minval=0.5, maxval=1.5)

    # cv2: Conv2d(c2, c2, k, s, groups=c2, bias=False) + BatchNorm2d(c2)
    w2_conv = jax.random.normal(ks[6], (c2, 1, k_sz, k_sz), jnp.float32) * 0.3
    g2 = jax.random.uniform(ks[7], (c2,), jnp.float32, minval=0.5, maxval=1.5)
    be2 = jax.random.normal(ks[8], (c2,), jnp.float32) * 0.1
    mu2 = jax.random.normal(ks[9], (c2,), jnp.float32) * 0.1
    var2 = jax.random.uniform(ks[10], (c2,), jnp.float32, minval=0.5, maxval=1.5)

    # Fold BN into the convs (matches ConvNormLayer_fuse deploy/eval semantics).
    w1f, b1f = fold_bn(w1_conv, g1, be1, mu1, var1)   # (c2, c1, 1, 1), (c2,)
    w2f, b2f = fold_bn(w2_conv, g2, be2, mu2, var2)   # (c2, 1, k, k),  (c2,)

    # Kernel-friendly layouts.
    w1_eff = w1f.reshape(c2, c1).T                    # (c1, c2)
    w2_eff = w2f.reshape(c2, k_sz * k_sz).T           # (k*k, c2)

    out = scdown_forward(x, w1_eff, b1f, w2_eff, b2f, k=k_sz, s=stride)
    out = jax.block_until_ready(out)

    ref = _reference(x, w1f, b1f, w2f, b2f, k_sz, stride)
    Ho = (H + 2 * ((k_sz - 1) // 2) - k_sz) // stride + 1
    Wo = (W + 2 * ((k_sz - 1) // 2) - k_sz) // stride + 1
    assert out.shape == (B, c2, Ho, Wo), out.shape
    assert jnp.allclose(out, ref, rtol=1e-4, atol=1e-4), "mismatch vs reference"
    print("KERNEL_OK")
</pallas_src>

<mosaic_0001>
module attributes {stable_mosaic.version = 11 : i64} {
  func.func @kernel(%arg0: i32, %arg1: i32, %arg2: memref<4x8xf32, #tpu.memory_space<vmem>>, %arg3: memref<1x8xf32, #tpu.memory_space<vmem>>, %arg4: memref<9x8xf32, #tpu.memory_space<vmem>>, %arg5: memref<1x8xf32, #tpu.memory_space<vmem>>, %arg6: memref<1x432x4xf32, #tpu.memory_space<vmem>>, %arg7: memref<1x8x8x8xf32, #tpu.memory_space<vmem>>, %arg8: memref<18x24x8xf32, #tpu.memory_space<vmem>>) attributes {dimension_semantics = [#tpu.dimension_semantics<parallel>, #tpu.dimension_semantics<parallel>], iteration_bounds = array<i64: 2, 1>, scalar_prefetch = 0 : i64, scratch_operands = 1 : i64, tpu.core_type = #tpu.core_type<tc>, window_params = [{transform_indices = @transform_0, window_bounds = array<i64: 4, 8>}, {transform_indices = @transform_1, window_bounds = array<i64: 1, 8>}, {transform_indices = @transform_2, window_bounds = array<i64: 9, 8>}, {transform_indices = @transform_3, window_bounds = array<i64: 1, 8>}, {transform_indices = @transform_4, window_bounds = array<i64: 1, 432, 4>}, {transform_indices = @transform_5, window_bounds = array<i64: 1, 8, 8, 8>}]} {
    %c0 = arith.constant 0 : index
    %c0_0 = arith.constant 0 : index
    %c0_1 = arith.constant 0 : index
    %0 = vector.load %arg6[%c0, %c0_0, %c0_1] : memref<1x432x4xf32, #tpu.memory_space<vmem>>, vector<1x432x4xf32>
    %1 = vector.shape_cast %0 : vector<1x432x4xf32> to vector<432x4xf32>
    %c0_2 = arith.constant 0 : index
    %c0_3 = arith.constant 0 : index
    %2 = vector.load %arg2[%c0_2, %c0_3] : memref<4x8xf32, #tpu.memory_space<vmem>>, vector<4x8xf32>
    %cst = arith.constant dense<0.000000e+00> : vector<432x8xf32>
    %3 = tpu.matmul %1, %2, %cst {dimension_numbers = #tpu.dot_dimension_numbers<[1], [0], [0], [1], [0, 0, 1, 1], [], []>} : vector<432x4xf32>, vector<4x8xf32>, vector<432x8xf32> -> vector<432x8xf32>
    %4 = vector.shape_cast %3 : vector<432x8xf32> to vector<18x24x8xf32>
    %5 = tpu.iota {dimensions = array<i32: 0>} : vector<18x24x1xi32>
    %6 = tpu.iota {dimensions = array<i32: 1>} : vector<18x24x1xi32>
    %c1_i32 = arith.constant 1 : i32
    %7 = vector.broadcast %c1_i32 : i32 to vector<18x24x1xi32>
    %8 = arith.cmpi sge, %5, %7 : vector<18x24x1xi32>
    %c17_i32 = arith.constant 17 : i32
    %9 = vector.broadcast %c17_i32 : i32 to vector<18x24x1xi32>
    %10 = arith.cmpi slt, %5, %9 : vector<18x24x1xi32>
    %11 = arith.andi %8, %10 : vector<18x24x1xi1>
    %c1_i32_4 = arith.constant 1 : i32
    %12 = vector.broadcast %c1_i32_4 : i32 to vector<18x24x1xi32>
    %13 = arith.cmpi sge, %6, %12 : vector<18x24x1xi32>
    %14 = arith.andi %11, %13 : vector<18x24x1xi1>
    %c17_i32_5 = arith.constant 17 : i32
    %15 = vector.broadcast %c17_i32_5 : i32 to vector<18x24x1xi32>
    %16 = arith.cmpi slt, %6, %15 : vector<18x24x1xi32>
    %17 = arith.andi %14, %16 : vector<18x24x1xi1>
    %18 = arith.extui %17 : vector<18x24x1xi1> to vector<18x24x1xi32>
    %19 = arith.sitofp %18 : vector<18x24x1xi32> to vector<18x24x1xf32>
    %c0_6 = arith.constant 0 : index
    %c0_7 = arith.constant 0 : index
    %20 = vector.load %arg3[%c0_6, %c0_7] : memref<1x8xf32, #tpu.memory_space<vmem>>, vector<1x8xf32>
    %21 = vector.shape_cast %20 : vector<1x8xf32> to vector<1x1x8xf32>
    %22 = vector.broadcast %19 : vector<18x24x1xf32> to vector<18x24x8xf32>
    %23 = vector.broadcast %21 : vector<1x1x8xf32> to vector<18x24x8xf32>
    %24 = arith.mulf %22, %23 : vector<18x24x8xf32>
    %25 = arith.addf %4, %24 : vector<18x24x8xf32>
    %c0_8 = arith.constant 0 : index
    %c0_9 = arith.constant 0 : index
    %c0_10 = arith.constant 0 : index
    %26 = vector.load %arg8[%c0_8, %c0_9, %c0_10] : memref<18x24x8xf32, #tpu.memory_space<vmem>>, vector<18x24x8xf32>
    tpu.vector_store %arg8[%c0_8, %c0_9, %c0_10], %25 {strides = array<i32>} : memref<18x24x8xf32, #tpu.memory_space<vmem>>, vector<18x24x8xf32>,
    %c0_11 = arith.constant 0 : index
    %c0_12 = arith.constant 0 : index
    %27 = vector.load %arg4[%c0_11, %c0_12] : memref<9x8xf32, #tpu.memory_space<vmem>>, vector<9x8xf32>
    %c0_13 = arith.constant 0 : index
    %c0_14 = arith.constant 0 : index
    %28 = vector.load %arg5[%c0_13, %c0_14] : memref<1x8xf32, #tpu.memory_space<vmem>>, vector<1x8xf32>
    %29 = vector.extract_strided_slice %27 {offsets = [0, 0], sizes = [1, 8], strides = [1, 1]} : vector<9x8xf32> to vector<1x8xf32>
    %30 = vector.extract_strided_slice %27 {offsets = [1, 0], sizes = [1, 8], strides = [1, 1]} : vector<9x8xf32> to vector<1x8xf32>
    %31 = vector.extract_strided_slice %27 {offsets = [2, 0], sizes = [1, 8], strides = [1, 1]} : vector<9x8xf32> to vector<1x8xf32>
    %32 = vector.extract_strided_slice %27 {offsets = [3, 0], sizes = [1, 8], strides = [1, 1]} : vector<9x8xf32> to vector<1x8xf32>
    %33 = vector.extract_strided_slice %27 {offsets = [4, 0], sizes = [1, 8], strides = [1, 1]} : vector<9x8xf32> to vector<1x8xf32>
    %34 = vector.extract_strided_slice %27 {offsets = [5, 0], sizes = [1, 8], strides = [1, 1]} : vector<9x8xf32> to vector<1x8xf32>
    %35 = vector.extract_strided_slice %27 {offsets = [6, 0], sizes = [1, 8], strides = [1, 1]} : vector<9x8xf32> to vector<1x8xf32>
    %36 = vector.extract_strided_slice %27 {offsets = [7, 0], sizes = [1, 8], strides = [1, 1]} : vector<9x8xf32> to vector<1x8xf32>
    %37 = vector.extract_strided_slice %27 {offsets = [8, 0], sizes = [1, 8], strides = [1, 1]} : vector<9x8xf32> to vector<1x8xf32>
    %c0_i32 = arith.constant 0 : i32
    %c8_i32 = arith.constant 8 : i32
    %38 = arith.addi %c0_i32, %c8_i32 : i32
    %c1_i32_15 = arith.constant 1 : i32
    scf.for %arg9 = %c0_i32 to %38 step %c1_i32_15  : i32 {
      %cst_17 = arith.constant 0.000000e+00 : f32
      %39 = vector.broadcast %cst_17 : f32 to vector<8x8xf32>
      %c2_i32 = arith.constant 2 : i32
      %40 = arith.muli %arg9, %c2_i32 : i32
      %c0_i32_18 = arith.constant 0 : i32
      %41 = arith.addi %40, %c0_i32_18 : i32
      %42 = arith.index_cast %41 : i32 to index
      %c0_19 = arith.constant 0 : index
      %c0_20 = arith.constant 0 : index
      %43 = tpu.strided_load %arg8[%42, %c0_19, %c0_20] {strides = array<i32: 1, 2, 1>} : memref<18x24x8xf32, #tpu.memory_space<vmem>>, vector<1x8x8xf32>
      %44 = vector.shape_cast %43 : vector<1x8x8xf32> to vector<8x8xf32>
      %45 = vector.broadcast %29 : vector<1x8xf32> to vector<8x8xf32>
      %46 = arith.mulf %44, %45 : vector<8x8xf32>
      %47 = arith.addf %39, %46 : vector<8x8xf32>
      %c2_i32_21 = arith.constant 2 : i32
      %48 = arith.muli %arg9, %c2_i32_21 : i32
      %c0_i32_22 = arith.constant 0 : i32
      %49 = arith.addi %48, %c0_i32_22 : i32
      %50 = arith.index_cast %49 : i32 to index
      %c1 = arith.constant 1 : index
      %c0_23 = arith.constant 0 : index
      %51 = tpu.strided_load %arg8[%50, %c1, %c0_23] {strides = array<i32: 1, 2, 1>} : memref<18x24x8xf32, #tpu.memory_space<vmem>>, vector<1x8x8xf32>
      %52 = vector.shape_cast %51 : vector<1x8x8xf32> to vector<8x8xf32>
      %53 = vector.broadcast %30 : vector<1x8xf32> to vector<8x8xf32>
      %54 = arith.mulf %52, %53 : vector<8x8xf32>
      %55 = arith.addf %47, %54 : vector<8x8xf32>
      %c2_i32_24 = arith.constant 2 : i32
      %56 = arith.muli %arg9, %c2_i32_24 : i32
      %c0_i32_25 = arith.constant 0 : i32
      %57 = arith.addi %56, %c0_i32_25 : i32
      %58 = arith.index_cast %57 : i32 to index
      %c2 = arith.constant 2 : index
      %c0_26 = arith.constant 0 : index
      %59 = tpu.strided_load %arg8[%58, %c2, %c0_26] {strides = array<i32: 1, 2, 1>} : memref<18x24x8xf32, #tpu.memory_space<vmem>>, vector<1x8x8xf32>
      %60 = vector.shape_cast %59 : vector<1x8x8xf32> to vector<8x8xf32>
      %61 = vector.broadcast %31 : vector<1x8xf32> to vector<8x8xf32>
      %62 = arith.mulf %60, %61 : vector<8x8xf32>
      %63 = arith.addf %55, %62 : vector<8x8xf32>
      %c2_i32_27 = arith.constant 2 : i32
      %64 = arith.muli %arg9, %c2_i32_27 : i32
      %c1_i32_28 = arith.constant 1 : i32
      %65 = arith.addi %64, %c1_i32_28 : i32
      %66 = arith.index_cast %65 : i32 to index
      %c0_29 = arith.constant 0 : index
      %c0_30 = arith.constant 0 : index
      %67 = tpu.strided_load %arg8[%66, %c0_29, %c0_30] {strides = array<i32: 1, 2, 1>} : memref<18x24x8xf32, #tpu.memory_space<vmem>>, vector<1x8x8xf32>
      %68 = vector.shape_cast %67 : vector<1x8x8xf32> to vector<8x8xf32>
      %69 = vector.broadcast %32 : vector<1x8xf32> to vector<8x8xf32>
      %70 = arith.mulf %68, %69 : vector<8x8xf32>
      %71 = arith.addf %63, %70 : vector<8x8xf32>
      %c2_i32_31 = arith.constant 2 : i32
      %72 = arith.muli %arg9, %c2_i32_31 : i32
      %c1_i32_32 = arith.constant 1 : i32
      %73 = arith.addi %72, %c1_i32_32 : i32
      %74 = arith.index_cast %73 : i32 to index
      %c1_33 = arith.constant 1 : index
      %c0_34 = arith.constant 0 : index
      %75 = tpu.strided_load %arg8[%74, %c1_33, %c0_34] {strides = array<i32: 1, 2, 1>} : memref<18x24x8xf32, #tpu.memory_space<vmem>>, vector<1x8x8xf32>
      %76 = vector.shape_cast %75 : vector<1x8x8xf32> to vector<8x8xf32>
      %77 = vector.broadcast %33 : vector<1x8xf32> to vector<8x8xf32>
      %78 = arith.mulf %76, %77 : vector<8x8xf32>
      %79 = arith.addf %71, %78 : vector<8x8xf32>
      %c2_i32_35 = arith.constant 2 : i32
      %80 = arith.muli %arg9, %c2_i32_35 : i32
      %c1_i32_36 = arith.constant 1 : i32
      %81 = arith.addi %80, %c1_i32_36 : i32
      %82 = arith.index_cast %81 : i32 to index
      %c2_37 = arith.constant 2 : index
      %c0_38 = arith.constant 0 : index
      %83 = tpu.strided_load %arg8[%82, %c2_37, %c0_38] {strides = array<i32: 1, 2, 1>} : memref<18x24x8xf32, #tpu.memory_space<vmem>>, vector<1x8x8xf32>
      %84 = vector.shape_cast %83 : vector<1x8x8xf32> to vector<8x8xf32>
      %85 = vector.broadcast %34 : vector<1x8xf32> to vector<8x8xf32>
      %86 = arith.mulf %84, %85 : vector<8x8xf32>
      %87 = arith.addf %79, %86 : vector<8x8xf32>
      %c2_i32_39 = arith.constant 2 : i32
      %88 = arith.muli %arg9, %c2_i32_39 : i32
      %c2_i32_40 = arith.constant 2 : i32
      %89 = arith.addi %88, %c2_i32_40 : i32
      %90 = arith.index_cast %89 : i32 to index
      %c0_41 = arith.constant 0 : index
      %c0_42 = arith.constant 0 : index
      %91 = tpu.strided_load %arg8[%90, %c0_41, %c0_42] {strides = array<i32: 1, 2, 1>} : memref<18x24x8xf32, #tpu.memory_space<vmem>>, vector<1x8x8xf32>
      %92 = vector.shape_cast %91 : vector<1x8x8xf32> to vector<8x8xf32>
      %93 = vector.broadcast %35 : vector<1x8xf32> to vector<8x8xf32>
      %94 = arith.mulf %92, %93 : vector<8x8xf32>
      %95 = arith.addf %87, %94 : vector<8x8xf32>
      %c2_i32_43 = arith.constant 2 : i32
      %96 = arith.muli %arg9, %c2_i32_43 : i32
      %c2_i32_44 = arith.constant 2 : i32
      %97 = arith.addi %96, %c2_i32_44 : i32
      %98 = arith.index_cast %97 : i32 to index
      %c1_45 = arith.constant 1 : index
      %c0_46 = arith.constant 0 : index
      %99 = tpu.strided_load %arg8[%98, %c1_45, %c0_46] {strides = array<i32: 1, 2, 1>} : memref<18x24x8xf32, #tpu.memory_space<vmem>>, vector<1x8x8xf32>
      %100 = vector.shape_cast %99 : vector<1x8x8xf32> to vector<8x8xf32>
      %101 = vector.broadcast %36 : vector<1x8xf32> to vector<8x8xf32>
      %102 = arith.mulf %100, %101 : vector<8x8xf32>
      %103 = arith.addf %95, %102 : vector<8x8xf32>
      %c2_i32_47 = arith.constant 2 : i32
      %104 = arith.muli %arg9, %c2_i32_47 : i32
      %c2_i32_48 = arith.constant 2 : i32
      %105 = arith.addi %104, %c2_i32_48 : i32
      %106 = arith.index_cast %105 : i32 to index
      %c2_49 = arith.constant 2 : index
      %c0_50 = arith.constant 0 : index
      %107 = tpu.strided_load %arg8[%106, %c2_49, %c0_50] {strides = array<i32: 1, 2, 1>} : memref<18x24x8xf32, #tpu.memory_space<vmem>>, vector<1x8x8xf32>
      %108 = vector.shape_cast %107 : vector<1x8x8xf32> to vector<8x8xf32>
      %109 = vector.broadcast %37 : vector<1x8xf32> to vector<8x8xf32>
      %110 = arith.mulf %108, %109 : vector<8x8xf32>
      %111 = arith.addf %103, %110 : vector<8x8xf32>
      %112 = vector.broadcast %28 : vector<1x8xf32> to vector<8x8xf32>
      %113 = arith.addf %111, %112 : vector<8x8xf32>
      %c0_51 = arith.constant 0 : index
      %114 = arith.index_cast %arg9 : i32 to index
      %c0_52 = arith.constant 0 : index
      %c0_53 = arith.constant 0 : index
      %115 = vector.load %arg7[%c0_51, %114, %c0_52, %c0_53] : memref<1x8x8x8xf32, #tpu.memory_space<vmem>>, vector<1x1x8x8xf32>
      %116 = vector.shape_cast %115 : vector<1x1x8x8xf32> to vector<8x8xf32>
      %117 = vector.shape_cast %113 : vector<8x8xf32> to vector<1x1x8x8xf32>
      tpu.vector_store %arg7[%c0_51, %114, %c0_52, %c0_53], %117 {strides = array<i32>} : memref<1x8x8x8xf32, #tpu.memory_space<vmem>>, vector<1x1x8x8xf32>,
    }
    %c8_i32_16 = arith.constant 8 : i32
    return
  }
  func.func @transform_0(%arg0: i32, %arg1: i32) -> (i32, i32) {
    %c0_i32 = arith.constant 0 : i32
    %c0_i32_0 = arith.constant 0 : i32
    return %c0_i32, %arg1 : i32, i32
  }
  func.func @transform_1(%arg0: i32, %arg1: i32) -> (i32, i32) {
    %c0_i32 = arith.constant 0 : i32
    %c0_i32_0 = arith.constant 0 : i32
    return %c0_i32, %arg1 : i32, i32
  }
  func.func @transform_2(%arg0: i32, %arg1: i32) -> (i32, i32) {
    %c0_i32 = arith.constant 0 : i32
    %c0_i32_0 = arith.constant 0 : i32
    return %c0_i32, %arg1 : i32, i32
  }
  func.func @transform_3(%arg0: i32, %arg1: i32) -> (i32, i32) {
    %c0_i32 = arith.constant 0 : i32
    %c0_i32_0 = arith.constant 0 : i32
    return %c0_i32, %arg1 : i32, i32
  }
  func.func @transform_4(%arg0: i32, %arg1: i32) -> (i32, i32, i32) {
    %c0_i32 = arith.constant 0 : i32
    %c0_i32_0 = arith.constant 0 : i32
    %c0_i32_1 = arith.constant 0 : i32
    return %arg0, %c0_i32, %c0_i32_0 : i32, i32, i32
  }
  func.func @transform_5(%arg0: i32, %arg1: i32) -> (i32, i32, i32, i32) {
    %c0_i32 = arith.constant 0 : i32
    %c0_i32_0 = arith.constant 0 : i32
    %c0_i32_1 = arith.constant 0 : i32
    return %arg0, %c0_i32, %c0_i32_0, %arg1 : i32, i32, i32, i32
  }
}

</mosaic_0001>

<llo_original>
// kernel: tpu_custom_call.1
$region0: #{tpu_custom_call.1}
  #allocation0 [shape = 'u32[]', space=smem, size = 0x4, offset = 0x4, fixed_abs, tag = 'smem constant byte address 0x4 - core index']
  #allocation1 [shape = 'u32[72,128]{1,0:T(1,128)}', space=vmem, size = 0x9000, scoped, tag = 'internal scratch']
  #allocation2 [shape = 'f32[18,24,8]{2,1,0:T(8,128)}', space=vmem, size = 0x36000, scoped, tag = 'scratch operand']
  %s0 = inlined_call_operand.vmem [shape: f32[4,8], index: 0, kind: input, shape index: {}]
  %s1 = inlined_call_operand.vmem [shape: f32[1,8], index: 1, kind: input, shape index: {}]
  %s2 = inlined_call_operand.vmem [shape: f32[9,8], index: 2, kind: input, shape index: {}]
  %s3 = inlined_call_operand.vmem [shape: f32[1,8], index: 3, kind: input, shape index: {}]
  %s4 = inlined_call_operand.vmem [shape: f32[2,432,4], index: 4, kind: input, shape index: {}]
  %s5 = inlined_call_operand.hbm [shape: f32[2,8,8,8], index: 5, kind: output, shape index: {}]
  %s6 = sld [smem:[#allocation0]]
  $region60: #{tpu_custom_call.1} parent=0
    _
  %s8 = ssub.s32 1, %s6
  %s9 = scalar_select 0, %s8, %s6
  $region1: #{tpu_custom_call.1} parent=0
    #allocation3 [shape = 'u8[65536]{0}', space=vmem, size = 0x10000, scoped, tag = 'output window, operand 0']
    #allocation4 [shape = 's32[2]{0}', space=sflag, size = 0x8, scoped, tag = 'scoped memory for tpu_custom_call.1']
    %10 = vsyncpa [#allocation4], 0
    %s11 = scalar_lea.sflag [#allocation4], 1
    %12 = vsyncpa %s11, 0
    loop: start=0, step=1, limit=4
    $region2: #{tpu_custom_call.1} parent=1 // loop_pre_header
      _
    $region3: #{tpu_custom_call.1} parent=1 // loop_header
      %s14 = sphi 0, %s18
      %p15 = scmp.ge.s32.totalorder %s14, 4
      %s21 = sphi 0, %s33
      %s22 = sphi 0, %s29
      %s23 = sphi 0, %s21
      %s24 = sphi 0, %s22
      %s25 = sphi 0, %s23
      %s26 = sphi 0, %s24
      %s36 = sphi 0, %s38
      %s39 = sphi 0, %s36
      %s40 = sphi 0, %s39
      %s56 = sphi 0, %s40
      %s62 = sphi 0, %s64
      %s65 = sphi 0, %s62
      %s66 = sphi 0, %s65
      %s82 = sphi 0, %s66
      %s88 = sphi 0, %s90
      %s91 = sphi 0, %s88
      %s92 = sphi 0, %s91
      %s108 = sphi 0, %s92
      %s114 = sphi 0, %s116
      %s117 = sphi 0, %s114
      %s118 = sphi 0, %s117
      %s134 = sphi 0, %s118
      %s140 = sphi 0, %s142
      %s143 = sphi 0, %s140
      %s144 = sphi 0, %s143
      %s160 = sphi 0, %s144
      %s168 = sphi 0, %s170
      %s171 = sphi 0, %s168
      %s172 = sphi 0, %s171
      %s188 = sphi 0, %s172
    $region4: #{tpu_custom_call.1} parent=1 // loop_header_branch
      %17 = sbr.rel (%p15) target = $region8
    $region5: #{tpu_custom_call.1} parent=1 // loop_body
      %s19 = ssub.s32 %s14, 1
      %s20 = ssub.s32 %s14, 2
      %s27 = sadd.s32 1, %s22
      %p28 = scmp.ge.s32.totalorder %s27, 1
      %s29 = scalar_select %p28, 0, %s27
      %s30 = sadd.s32 1, %s21
      %s31 = scalar_select %p28, %s30, %s21
      %p32 = scmp.ge.s32.totalorder %s31, 2
      %s33 = scalar_select %p32, 0, %s31
      %s34 = ssub.s32 %s22, %s29
      %p35 = scmp.eq.s32.totalorder %s34, 0
      %s37 = sadd.s32 %s36, 1
      %s38 = scalar_select %p35, %s36, %s37
      %p41 = pneg %p35
      %p42 = scmp.eq.s32.totalorder %s14, 1
      %p43 = por %p41, %p42
      %p44 = scmp.ne.s32.totalorder %s36, %s39
      %p45 = scmp.eq.s32.totalorder %s14, 0
      %p46 = por %p44, %p45
      %p47 = scmp.ne.s32.totalorder %s36, %s39
      %p48 = scmp.eq.s32.totalorder %s19, 1
      %p49 = por %p47, %p48
      %p50 = scmp.ne.s32.totalorder %s39, %s40
      %p51 = scmp.eq.s32.totalorder %s19, 0
      %p52 = por %p50, %p51
      %p53 = scmp.ne.s32.totalorder %s39, %s40
      %p54 = scmp.eq.s32.totalorder %s20, 1
      %p55 = por %p53, %p54
      %p57 = scmp.ne.s32.totalorder %s40, %s56
      %p58 = scmp.eq.s32.totalorder %s20, 0
      %p59 = por %p57, %p58
      %s60 = ssub.s32 %s22, %s29
      %p61 = scmp.eq.s32.totalorder %s60, 0
      %s63 = sadd.s32 %s62, 1
      %s64 = scalar_select %p61, %s62, %s63
      %p67 = pneg %p61
      %p68 = scmp.eq.s32.totalorder %s14, 1
      %p69 = por %p67, %p68
      %p70 = scmp.ne.s32.totalorder %s62, %s65
      %p71 = scmp.eq.s32.totalorder %s14, 0
      %p72 = por %p70, %p71
      %p73 = scmp.ne.s32.totalorder %s62, %s65
      %p74 = scmp.eq.s32.totalorder %s19, 1
      %p75 = por %p73, %p74
      %p76 = scmp.ne.s32.totalorder %s65, %s66
      %p77 = scmp.eq.s32.totalorder %s19, 0
      %p78 = por %p76, %p77
      %p79 = scmp.ne.s32.totalorder %s65, %s66
      %p80 = scmp.eq.s32.totalorder %s20, 1
      %p81 = por %p79, %p80
      %p83 = scmp.ne.s32.totalorder %s66, %s82
      %p84 = scmp.eq.s32.totalorder %s20, 0
      %p85 = por %p83, %p84
      %s86 = ssub.s32 %s22, %s29
      %p87 = scmp.eq.s32.totalorder %s86, 0
      %s89 = sadd.s32 %s88, 1
      %s90 = scalar_select %p87, %s88, %s89
      %p93 = pneg %p87
      %p94 = scmp.eq.s32.totalorder %s14, 1
      %p95 = por %p93, %p94
      %p96 = scmp.ne.s32.totalorder %s88, %s91
      %p97 = scmp.eq.s32.totalorder %s14, 0
      %p98 = por %p96, %p97
      %p99 = scmp.ne.s32.totalorder %s88, %s91
      %p100 = scmp.eq.s32.totalorder %s19, 1
      %p101 = por %p99, %p100
      %p102 = scmp.ne.s32.totalorder %s91, %s92
      %p103 = scmp.eq.s32.totalorder %s19, 0
      %p104 = por %p102, %p103
      %p105 = scmp.ne.s32.totalorder %s91, %s92
      %p106 = scmp.eq.s32.totalorder %s20, 1
      %p107 = por %p105, %p106
      %p109 = scmp.ne.s32.totalorder %s92, %s108
      %p110 = scmp.eq.s32.totalorder %s20, 0
      %p111 = por %p109, %p110
      %s112 = ssub.s32 %s22, %s29
      %p113 = scmp.eq.s32.totalorder %s112, 0
      %s115 = sadd.s32 %s114, 1
      %s116 = scalar_select %p113, %s114, %s115
      %p119 = pneg %p113
      %p120 = scmp.eq.s32.totalorder %s14, 1
      %p121 = por %p119, %p120
      %p122 = scmp.ne.s32.totalorder %s114, %s117
      %p123 = scmp.eq.s32.totalorder %s14, 0
      %p124 = por %p122, %p123
      %p125 = scmp.ne.s32.totalorder %s114, %s117
      %p126 = scmp.eq.s32.totalorder %s19, 1
      %p127 = por %p125, %p126
      %p128 = scmp.ne.s32.totalorder %s117, %s118
      %p129 = scmp.eq.s32.totalorder %s19, 0
      %p130 = por %p128, %p129
      %p131 = scmp.ne.s32.totalorder %s117, %s118
      %p132 = scmp.eq.s32.totalorder %s20, 1
      %p133 = por %p131, %p132
      %p135 = scmp.ne.s32.totalorder %s118, %s134
      %p136 = scmp.eq.s32.totalorder %s20, 0
      %p137 = por %p135, %p136
      %s138 = ssub.s32 %s21, %s33
      %p139 = scmp.eq.s32.totalorder %s138, 0
      %s141 = sadd.s32 %s140, 1
      %s142 = scalar_select %p139, %s140, %s141
      %p145 = pneg %p139
      %p146 = scmp.eq.s32.totalorder %s14, 1
      %p147 = por %p145, %p146
      %p148 = scmp.ne.s32.totalorder %s140, %s143
      %p149 = scmp.eq.s32.totalorder %s14, 0
      %p150 = por %p148, %p149
      %p151 = scmp.ne.s32.totalorder %s140, %s143
      %p152 = scmp.eq.s32.totalorder %s19, 1
      %p153 = por %p151, %p152
      %p154 = scmp.ne.s32.totalorder %s143, %s144
      %p155 = scmp.eq.s32.totalorder %s19, 0
      %p156 = por %p154, %p155
      %p157 = scmp.ne.s32.totalorder %s143, %s144
      %p158 = scmp.eq.s32.totalorder %s20, 1
      %p159 = por %p157, %p158
      %p161 = scmp.ne.s32.totalorder %s144, %s160
      %p162 = scmp.eq.s32.totalorder %s20, 0
      %p163 = por %p161, %p162
      %s164 = ssub.s32 %s21, %s33
      %s165 = ssub.s32 %s22, %s29
      %s166 = sor.u32 %s164, %s165
      %p167 = scmp.eq.s32.totalorder %s166, 0
      %s169 = sadd.s32 %s168, 1
      %s170 = scalar_select %p167, %s168, %s169
      %p173 = pneg %p167
      %p174 = scmp.eq.s32.totalorder %s14, 1
      %p175 = por %p173, %p174
      %p176 = scmp.ne.s32.totalorder %s168, %s171
      %p177 = scmp.eq.s32.totalorder %s14, 0
      %p178 = por %p176, %p177
      %p179 = scmp.ne.s32.totalorder %s168, %s171
      %p180 = scmp.eq.s32.totalorder %s19, 1
      %p181 = por %p179, %p180
      %p182 = scmp.ne.s32.totalorder %s171, %s172
      %p183 = scmp.eq.s32.totalorder %s19, 0
      %p184 = por %p182, %p183
      %p185 = scmp.ne.s32.totalorder %s171, %s172
      %p186 = scmp.eq.s32.totalorder %s20, 1
      %p187 = por %p185, %p186
      %p189 = scmp.ne.s32.totalorder %s172, %s188
      %p190 = scmp.eq.s32.totalorder %s20, 0
      %p191 = por %p189, %p190
      %p192 = scmp.le.s32.totalorder 1, %s14
      %p193 = scmp.lt.s32.totalorder %s14, 3
      %p194 = pnand %p192, %p193
      %p195 = pneg %p194
      // Predicated region
      $region9: #{tpu_custom_call.1} parent=5 // pred_check
        _
      $region10: #{tpu_custom_call.1} parent=5 // pred_check_branch
        %197 = sbr.rel (%p194) target = $region12
      $region11: #{tpu_custom_call.1} parent=5 // pred_region
        %s198 = ssub.s32 %s14, 1
        // Predicated region
        $region13: #{tpu_custom_call.1} parent=11 // pred_check
          %p199 = pneg %p52
        $region14: #{tpu_custom_call.1} parent=11 // pred_check_branch
          %201 = sbr.rel (%p199) target = $region16
        $region15: #{tpu_custom_call.1} parent=11 // pred_region
          %p202 = scmp.lt.s32.totalorder %s24, 0
          %s203 = scalar_select %p202, %s24, 0
          %s204 = smul.addr %s203, 4
          %s205 = scalar_lea.vmem %s0, %s204
        $region16: #{tpu_custom_call.1} parent=11 // pred_fallthru
          _
        // Predicated region
        $region17: #{tpu_custom_call.1} parent=11 // pred_check
          %p206 = pneg %p78
        $region18: #{tpu_custom_call.1} parent=11 // pred_check_branch
          %208 = sbr.rel (%p206) target = $region20
        $region19: #{tpu_custom_call.1} parent=11 // pred_region
          %p209 = scmp.lt.s32.totalorder %s24, 0
          %s210 = scalar_select %p209, %s24, 0
          %s211 = scalar_lea.vmem %s1, %s210
        $region20: #{tpu_custom_call.1} parent=11 // pred_fallthru
          _
        // Predicated region
        $region21: #{tpu_custom_call.1} parent=11 // pred_check
          %p212 = pneg %p104
        $region22: #{tpu_custom_call.1} parent=11 // pred_check_branch
          %214 = sbr.rel (%p212) target = $region24
        $region23: #{tpu_custom_call.1} parent=11 // pred_region
          %p215 = scmp.lt.s32.totalorder %s24, 0
          %s216 = scalar_select %p215, %s24, 0
          %s217 = smul.addr %s216, 8
          %s218 = scalar_lea.vmem %s2, %s217
        $region24: #{tpu_custom_call.1} parent=11 // pred_fallthru
          _
        // Predicated region
        $region25: #{tpu_custom_call.1} parent=11 // pred_check
          %p219 = pneg %p130
        $region26: #{tpu_custom_call.1} parent=11 // pred_check_branch
          %221 = sbr.rel (%p219) target = $region28
        $region27: #{tpu_custom_call.1} parent=11 // pred_region
          %p222 = scmp.lt.s32.totalorder %s24, 0
          %s223 = scalar_select %p222, %s24, 0
          %s224 = scalar_lea.vmem %s3, %s223
        $region28: #{tpu_custom_call.1} parent=11 // pred_fallthru
          _
      $region12: #{tpu_custom_call.1} parent=5 // pred_fallthru
        _
      %p225 = scmp.lt.s32.totalorder %s14, 2
      // Predicated region
      $region29: #{tpu_custom_call.1} parent=5 // pred_check
        %p226 = pneg %p225
      $region30: #{tpu_custom_call.1} parent=5 // pred_check_branch
        %228 = sbr.rel (%p226) target = $region32
      $region31: #{tpu_custom_call.1} parent=5 // pred_region
        // Predicated region
        $region33: #{tpu_custom_call.1} parent=31 // pred_check
          %p229 = pneg %p150
        $region34: #{tpu_custom_call.1} parent=31 // pred_check_branch
          %231 = sbr.rel (%p229) target = $region36
        $region35: #{tpu_custom_call.1} parent=31 // pred_region
          %p232 = scmp.lt.s32.totalorder %s21, 1
          %s233 = scalar_select %p232, %s21, 1
          %s234 = smul.addr %s233, 54
          %s235 = smul.addr %s234, 8
          %s236 = scalar_lea.vmem %s4, %s235
        $region36: #{tpu_custom_call.1} parent=31 // pred_fallthru
          _
      $region32: #{tpu_custom_call.1} parent=5 // pred_fallthru
        _
      %p237 = scmp.le.s32.totalorder 1, %s14
      %p238 = scmp.lt.s32.totalorder %s14, 3
      %p239 = pnand %p237, %p238
      %p240 = pneg %p239
      // Predicated region
      $region37: #{tpu_custom_call.1} parent=5 // pred_check
        _
      $region38: #{tpu_custom_call.1} parent=5 // pred_check_branch
        %242 = sbr.rel (%p239) target = $region40
      $region39: #{tpu_custom_call.1} parent=5 // pred_region
        %s243 = ssub.s32 %s14, 1
        %p244 = scmp.lt.s32.totalorder %s24, 0
        %s245 = scalar_select %p244, %s24, 0
        %s246 = smul.addr %s245, 4
        %s247 = scalar_lea.vmem %s0, %s246
        %p248 = pneg %p52
        %p249 = pneg %p49
        %p250 = scmp.lt.s32.totalorder %s24, 0
        %s251 = scalar_select %p250, %s24, 0
        %s252 = scalar_lea.vmem %s1, %s251
        %p253 = pneg %p78
        %p254 = pneg %p75
        %p255 = scmp.lt.s32.totalorder %s24, 0
        %s256 = scalar_select %p255, %s24, 0
        %s257 = smul.addr %s256, 8
        %s258 = scalar_lea.vmem %s2, %s257
        %p259 = pneg %p104
        %p260 = pneg %p101
        %p261 = scmp.lt.s32.totalorder %s24, 0
        %s262 = scalar_select %p261, %s24, 0
        %s263 = scalar_lea.vmem %s3, %s262
        %p264 = pneg %p130
        %p265 = pneg %p127
        %p266 = scmp.lt.s32.totalorder %s23, 1
        %s267 = scalar_select %p266, %s23, 1
        %s268 = smul.addr %s267, 54
        %s269 = smul.addr %s268, 8
        %s270 = scalar_lea.vmem %s4, %s269
        %p271 = pneg %p156
        %p272 = pneg %p153
        %p273 = pneg %p184
        %p274 = pneg %p181
        %s275 = sand.u32 %s171, 1
        %s276 = scalar_lea.sflag [#allocation4], %s275
        %s277 = sand.u32 %s171, 1
        %s278 = smul.addr %s277, 64
        %s279 = scalar_lea.vmem [#allocation3], %s278
        %p280 = scmp.lt.s32.totalorder %s24, 0
        %s281 = scalar_select %p280, %s24, 0
        %s282 = smul.addr %s281, 4
        %s283 = scalar_lea.vmem %s0, %s282
        %p284 = scmp.lt.s32.totalorder %s24, 0
        %s285 = scalar_select %p284, %s24, 0
        %s286 = scalar_lea.vmem %s1, %s285
        %p287 = scmp.lt.s32.totalorder %s24, 0
        %s288 = scalar_select %p287, %s24, 0
        %s289 = smul.addr %s288, 8
        %s290 = scalar_lea.vmem %s2, %s289
        %p291 = scmp.lt.s32.totalorder %s24, 0
        %s292 = scalar_select %p291, %s24, 0
        %s293 = scalar_lea.vmem %s3, %s292
        %p294 = scmp.lt.s32.totalorder %s23, 1
        %s295 = scalar_select %p294, %s23, 1
        %s296 = smul.addr %s295, 54
        %s297 = smul.addr %s296, 8
        %s298 = scalar_lea.vmem %s4, %s297
        %v299 = vld [vmem:[%s298] sm:$0xff]
        %v300 = vld [vmem:[%s298 + $0x8] sm:$0xff]
        %v301 = vld [vmem:[%s298 + $0x10] sm:$0xff]
        %v302 = vld [vmem:[%s298 + $0x18] sm:$0xff]
        %v303 = vld [vmem:[%s298 + $0x20] sm:$0xff]
        %v304 = vld [vmem:[%s298 + $0x28] sm:$0xff]
        %v305 = vld [vmem:[%s298 + $0x30] sm:$0xff]
        %v306 = vld [vmem:[%s298 + $0x38] sm:$0xff]
        %v307 = vld [vmem:[%s298 + $0x40] sm:$0xff]
        %v308 = vld [vmem:[%s298 + $0x48] sm:$0xff]
        %v309 = vld [vmem:[%s298 + $0x50] sm:$0xff]
        %v310 = vld [vmem:[%s298 + $0x58] sm:$0xff]
        %v311 = vld [vmem:[%s298 + $0x60] sm:$0xff]
        %v312 = vld [vmem:[%s298 + $0x68] sm:$0xff]
        %v313 = vld [vmem:[%s298 + $0x70] sm:$0xff]
        %v314 = vld [vmem:[%s298 + $0x78] sm:$0xff]
        %v315 = vld [vmem:[%s298 + $0x80] sm:$0xff]
        %v316 = vld [vmem:[%s298 + $0x88] sm:$0xff]
        %v317 = vld [vmem:[%s298 + $0x90] sm:$0xff]
        %v318 = vld [vmem:[%s298 + $0x98] sm:$0xff]
        %v319 = vld [vmem:[%s298 + $0xa0] sm:$0xff]
        %v320 = vld [vmem:[%s298 + $0xa8] sm:$0xff]
        %v321 = vld [vmem:[%s298 + $0xb0] sm:$0xff]
        %v322 = vld [vmem:[%s298 + $0xb8] sm:$0xff]
        %v323 = vld [vmem:[%s298 + $0xc0] sm:$0xff]
        %v324 = vld [vmem:[%s298 + $0xc8] sm:$0xff]
        %v325 = vld [vmem:[%s298 + $0xd0] sm:$0xff]
        %v326 = vld [vmem:[%s298 + $0xd8] sm:$0xff]
        %v327 = vld [vmem:[%s298 + $0xe0] sm:$0xff]
        %v328 = vld [vmem:[%s298 + $0xe8] sm:$0xff]
        %v329 = vld [vmem:[%s298 + $0xf0] sm:$0xff]
        %v330 = vld [vmem:[%s298 + $0xf8] sm:$0xff]
        %v331 = vld [vmem:[%s298 + $0x100] sm:$0xff]
        %v332 = vld [vmem:[%s298 + $0x108] sm:$0xff]
        %v333 = vld [vmem:[%s298 + $0x110] sm:$0xff]
        %v334 = vld [vmem:[%s298 + $0x118] sm:$0xff]
        %v335 = vld [vmem:[%s298 + $0x120] sm:$0xff]
        %v336 = vld [vmem:[%s298 + $0x128] sm:$0xff]
        %v337 = vld [vmem:[%s298 + $0x130] sm:$0xff]
        %v338 = vld [vmem:[%s298 + $0x138] sm:$0xff]
        %v339 = vld [vmem:[%s298 + $0x140] sm:$0xff]
        %v340 = vld [vmem:[%s298 + $0x148] sm:$0xff]
        %v341 = vld [vmem:[%s298 + $0x150] sm:$0xff]
        %v342 = vld [vmem:[%s298 + $0x158] sm:$0xff]
        %v343 = vld [vmem:[%s298 + $0x160] sm:$0xff]
        %v344 = vld [vmem:[%s298 + $0x168] sm:$0xff]
        %v345 = vld [vmem:[%s298 + $0x170] sm:$0xff]
        %v346 = vld [vmem:[%s298 + $0x178] sm:$0xff]
        %v347 = vld [vmem:[%s298 + $0x180] sm:$0xff]
        %v348 = vld [vmem:[%s298 + $0x188] sm:$0xff]
        %v349 = vld [vmem:[%s298 + $0x190] sm:$0xff]
        %v350 = vld [vmem:[%s298 + $0x198] sm:$0xff]
        %v351 = vld [vmem:[%s298 + $0x1a0] sm:$0xff]
        %v352 = vld [vmem:[%s298 + $0x1a8] sm:$0xff]
        %v353 = vld [vmem:[%s283] sm:$0xf]
        %vm354 = vcmask 31744
        %v356 = vsel %vm354, %v299, 0
        %v359 = vsel %vm354, %v300, 0
        %v362 = vsel %vm354, %v301, 0
        %v365 = vsel %vm354, %v302, 0
        %v368 = vsel %vm354, %v303, 0
        %v371 = vsel %vm354, %v304, 0
        %v374 = vsel %vm354, %v305, 0
        %v377 = vsel %vm354, %v306, 0
        %v380 = vsel %vm354, %v307, 0
        %v383 = vsel %vm354, %v308, 0
        %v386 = vsel %vm354, %v309, 0
        %v389 = vsel %vm354, %v310, 0
        %v392 = vsel %vm354, %v311, 0
        %v395 = vsel %vm354, %v312, 0
        %v398 = vsel %vm354, %v313, 0
        %v401 = vsel %vm354, %v314, 0
        %v404 = vsel %vm354, %v315, 0
        %v407 = vsel %vm354, %v316, 0
        %v410 = vsel %vm354, %v317, 0
        %v413 = vsel %vm354, %v318, 0
        %v416 = vsel %vm354, %v319, 0
        %v419 = vsel %vm354, %v320, 0
        %v422 = vsel %vm354, %v321, 0
        %v425 = vsel %vm354, %v322, 0
        %v428 = vsel %vm354, %v323, 0
        %v431 = vsel %vm354, %v324, 0
        %v434 = vsel %vm354, %v325, 0
        %v437 = vsel %vm354, %v326, 0
        %v440 = vsel %vm354, %v327, 0
        %v443 = vsel %vm354, %v328, 0
        %v446 = vsel %vm354, %v329, 0
        %v449 = vsel %vm354, %v330, 0
        %v452 = vsel %vm354, %v331, 0
        %v455 = vsel %vm354, %v332, 0
        %v458 = vsel %vm354, %v333, 0
        %v461 = vsel %vm354, %v334, 0
        %v464 = vsel %vm354, %v335, 0
        %v467 = vsel %vm354, %v336, 0
        %v470 = vsel %vm354, %v337, 0
        %v473 = vsel %vm354, %v338, 0
        %v476 = vsel %vm354, %v339, 0
        %v479 = vsel %vm354, %v340, 0
        %v482 = vsel %vm354, %v341, 0
        %v485 = vsel %vm354, %v342, 0
        %v488 = vsel %vm354, %v343, 0
        %v491 = vsel %vm354, %v344, 0
        %v494 = vsel %vm354, %v345, 0
        %v497 = vsel %vm354, %v346, 0
        %v500 = vsel %vm354, %v347, 0
        %v503 = vsel %vm354, %v348, 0
        %v506 = vsel %vm354, %v349, 0
        %v509 = vsel %vm354, %v350, 0
        %v512 = vsel %vm354, %v351, 0
        %v515 = vsel %vm354, %v352, 0
        %vm517 = vcmask 1043456
        %v519 = vsel %vm517, %v353, 0
        %521 = vmatpush.msra.mxu0 0.0
        %522 = vmatpush.msra.mxu0 0.0
        %523 = vmatpush.msra.mxu0 0.0
        %524 = vmatpush.msra.mxu0 0.0
        %525 = vmatpush.msra.mxu0 0.0
        %526 = vmatpush.msra.mxu0 0.0
        %527 = vmatpush.msra.mxu0 0.0
        %528 = vmatpush.msra.mxu0 0.0
        %529 = vmatpush.msra.mxu0 0.0
        %530 = vmatpush.msra.mxu0 0.0
        %531 = vmatpush.msra.mxu0 0.0
        %532 = vmatpush.msra.mxu0 0.0
        %533 = vmatpush.msra.mxu0 0.0
        %534 = vmatpush.msra.mxu0 0.0
        %535 = vmatpush.msra.mxu0 0.0
        %536 = vmatpush.msra.mxu0 %v519
        %537 = vmatmul.f32.gmra.mxu0 %v356
        %v538 = vpop.f32.mrf.mxu0
        %v539 = vadd.f32 0.0, %v538
        %540 = vmatmul.f32.gmra.mxu0 %v359
        %v541 = vpop.f32.mrf.mxu0
        %v542 = vadd.f32 0.0, %v541
        %543 = vmatmul.f32.gmra.mxu0 %v362
        %v544 = vpop.f32.mrf.mxu0
        %v545 = vadd.f32 0.0, %v544
        %546 = vmatmul.f32.gmra.mxu0 %v365
        %v547 = vpop.f32.mrf.mxu0
        %v548 = vadd.f32 0.0, %v547
        %549 = vmatmul.f32.gmra.mxu0 %v368
        %v550 = vpop.f32.mrf.mxu0
        %v551 = vadd.f32 0.0, %v550
        %552 = vmatmul.f32.gmra.mxu0 %v371
        %v553 = vpop.f32.mrf.mxu0
        %v554 = vadd.f32 0.0, %v553
        %555 = vmatmul.f32.gmra.mxu0 %v374
        %v556 = vpop.f32.mrf.mxu0
        %v557 = vadd.f32 0.0, %v556
        %558 = vmatmul.f32.gmra.mxu0 %v377
        %v559 = vpop.f32.mrf.mxu0
        %v560 = vadd.f32 0.0, %v559
        %561 = vmatmul.f32.gmra.mxu0 %v380
        %v562 = vpop.f32.mrf.mxu0
        %v563 = vadd.f32 0.0, %v562
        %564 = vmatmul.f32.gmra.mxu0 %v383
        %v565 = vpop.f32.mrf.mxu0
        %v566 = vadd.f32 0.0, %v565
        %567 = vmatmul.f32.gmra.mxu0 %v386
        %v568 = vpop.f32.mrf.mxu0
        %v569 = vadd.f32 0.0, %v568
        %570 = vmatmul.f32.gmra.mxu0 %v389
        %v571 = vpop.f32.mrf.mxu0
        %v572 = vadd.f32 0.0, %v571
        %573 = vmatmul.f32.gmra.mxu0 %v392
        %v574 = vpop.f32.mrf.mxu0
        %v575 = vadd.f32 0.0, %v574
        %576 = vmatmul.f32.gmra.mxu0 %v395
        %v577 = vpop.f32.mrf.mxu0
        %v578 = vadd.f32 0.0, %v577
        %579 = vmatmul.f32.gmra.mxu0 %v398
        %v580 = vpop.f32.mrf.mxu0
        %v581 = vadd.f32 0.0, %v580
        %582 = vmatmul.f32.gmra.mxu0 %v401
        %v583 = vpop.f32.mrf.mxu0
        %v584 = vadd.f32 0.0, %v583
        %585 = vmatmul.f32.gmra.mxu0 %v404
        %v586 = vpop.f32.mrf.mxu0
        %v587 = vadd.f32 0.0, %v586
        %588 = vmatmul.f32.gmra.mxu0 %v407
        %v589 = vpop.f32.mrf.mxu0
        %v590 = vadd.f32 0.0, %v589
        %591 = vmatmul.f32.gmra.mxu0 %v410
        %v592 = vpop.f32.mrf.mxu0
        %v593 = vadd.f32 0.0, %v592
        %594 = vmatmul.f32.gmra.mxu0 %v413
        %v595 = vpop.f32.mrf.mxu0
        %v596 = vadd.f32 0.0, %v595
        %597 = vmatmul.f32.gmra.mxu0 %v416
        %v598 = vpop.f32.mrf.mxu0
        %v599 = vadd.f32 0.0, %v598
        %600 = vmatmul.f32.gmra.mxu0 %v419
        %v601 = vpop.f32.mrf.mxu0
        %v602 = vadd.f32 0.0, %v601
        %603 = vmatmul.f32.gmra.mxu0 %v422
        %v604 = vpop.f32.mrf.mxu0
        %v605 = vadd.f32 0.0, %v604
        %606 = vmatmul.f32.gmra.mxu0 %v425
        %v607 = vpop.f32.mrf.mxu0
        %v608 = vadd.f32 0.0, %v607
        %609 = vmatmul.f32.gmra.mxu0 %v428
        %v610 = vpop.f32.mrf.mxu0
        %v611 = vadd.f32 0.0, %v610
        %612 = vmatmul.f32.gmra.mxu0 %v431
        %v613 = vpop.f32.mrf.mxu0
        %v614 = vadd.f32 0.0, %v613
        %615 = vmatmul.f32.gmra.mxu0 %v434
        %v616 = vpop.f32.mrf.mxu0
        %v617 = vadd.f32 0.0, %v616
        %618 = vmatmul.f32.gmra.mxu0 %v437
        %v619 = vpop.f32.mrf.mxu0
        %v620 = vadd.f32 0.0, %v619
        %621 = vmatmul.f32.gmra.mxu0 %v440
        %v622 = vpop.f32.mrf.mxu0
        %v623 = vadd.f32 0.0, %v622
        %624 = vmatmul.f32.gmra.mxu0 %v443
        %v625 = vpop.f32.mrf.mxu0
        %v626 = vadd.f32 0.0, %v625
        %627 = vmatmul.f32.gmra.mxu0 %v446
        %v628 = vpop.f32.mrf.mxu0
        %v629 = vadd.f32 0.0, %v628
        %630 = vmatmul.f32.gmra.mxu0 %v449
        %v631 = vpop.f32.mrf.mxu0
        %v632 = vadd.f32 0.0, %v631
        %633 = vmatmul.f32.gmra.mxu0 %v452
        %v634 = vpop.f32.mrf.mxu0
        %v635 = vadd.f32 0.0, %v634
        %636 = vmatmul.f32.gmra.mxu0 %v455
        %v637 = vpop.f32.mrf.mxu0
        %v638 = vadd.f32 0.0, %v637
        %639 = vmatmul.f32.gmra.mxu0 %v458
        %v640 = vpop.f32.mrf.mxu0
        %v641 = vadd.f32 0.0, %v640
        %642 = vmatmul.f32.gmra.mxu0 %v461
        %v643 = vpop.f32.mrf.mxu0
        %v644 = vadd.f32 0.0, %v643
        %645 = vmatmul.f32.gmra.mxu0 %v464
        %v646 = vpop.f32.mrf.mxu0
        %v647 = vadd.f32 0.0, %v646
        %648 = vmatmul.f32.gmra.mxu0 %v467
        %v649 = vpop.f32.mrf.mxu0
        %v650 = vadd.f32 0.0, %v649
        %651 = vmatmul.f32.gmra.mxu0 %v470
        %v652 = vpop.f32.mrf.mxu0
        %v653 = vadd.f32 0.0, %v652
        %654 = vmatmul.f32.gmra.mxu0 %v473
        %v655 = vpop.f32.mrf.mxu0
        %v656 = vadd.f32 0.0, %v655
        %657 = vmatmul.f32.gmra.mxu0 %v476
        %v658 = vpop.f32.mrf.mxu0
        %v659 = vadd.f32 0.0, %v658
        %660 = vmatmul.f32.gmra.mxu0 %v479
        %v661 = vpop.f32.mrf.mxu0
        %v662 = vadd.f32 0.0, %v661
        %663 = vmatmul.f32.gmra.mxu0 %v482
        %v664 = vpop.f32.mrf.mxu0
        %v665 = vadd.f32 0.0, %v664
        %666 = vmatmul.f32.gmra.mxu0 %v485
        %v667 = vpop.f32.mrf.mxu0
        %v668 = vadd.f32 0.0, %v667
        %669 = vmatmul.f32.gmra.mxu0 %v488
        %v670 = vpop.f32.mrf.mxu0
        %v671 = vadd.f32 0.0, %v670
        %672 = vmatmul.f32.gmra.mxu0 %v491
        %v673 = vpop.f32.mrf.mxu0
        %v674 = vadd.f32 0.0, %v673
        %675 = vmatmul.f32.gmra.mxu0 %v494
        %v676 = vpop.f32.mrf.mxu0
        %v677 = vadd.f32 0.0, %v676
        %678 = vmatmul.f32.gmra.mxu0 %v497
        %v679 = vpop.f32.mrf.mxu0
        %v680 = vadd.f32 0.0, %v679
        %681 = vmatmul.f32.gmra.mxu0 %v500
        %v682 = vpop.f32.mrf.mxu0
        %v683 = vadd.f32 0.0, %v682
        %684 = vmatmul.f32.gmra.mxu0 %v503
        %v685 = vpop.f32.mrf.mxu0
        %v686 = vadd.f32 0.0, %v685
        %687 = vmatmul.f32.gmra.mxu0 %v506
        %v688 = vpop.f32.mrf.mxu0
        %v689 = vadd.f32 0.0, %v688
        %690 = vmatmul.f32.gmra.mxu0 %v509
        %v691 = vpop.f32.mrf.mxu0
        %v692 = vadd.f32 0.0, %v691
        %693 = vmatmul.f32.gmra.mxu0 %v512
        %v694 = vpop.f32.mrf.mxu0
        %v695 = vadd.f32 0.0, %v694
        %696 = vmatmul.f32.gmra.mxu0 %v515
        %v697 = vpop.f32.mrf.mxu0
        %v698 = vadd.f32 0.0, %v697
        %699 = vdwg.mxu0
        %v700 = vlaneseq
        %v701 = vshrl.u32 %v700, 7
        %v702 = vadd.s32 %v701, 8
        %v703 = vadd.s32 %v701, 16
        %vm704 = vcmp.ge.s32.totalorder %v701, 1
        %vm705 = vcmp.ge.s32.totalorder %v702, 1
        %vm706 = vcmp.ge.s32.totalorder %v703, 1
        %vm707 = vmand 0, %vm704
        %vm708 = vmand 0, %vm705
        %vm709 = vmand 0, %vm706
        %vm710 = vmand 1, %vm704
        %vm711 = vmand 1, %vm705
        %vm712 = vmand 1, %vm706
        %vm713 = vcmp.lt.s32.totalorder %v701, 17
        %vm714 = vcmp.lt.s32.totalorder %v702, 17
        %vm715 = vcmp.lt.s32.totalorder %v703, 17
        %vm716 = vmand %vm707, %vm713
        %vm717 = vmand %vm708, %vm714
        %vm718 = vmand %vm709, %vm715
        %vm719 = vmand %vm710, %vm713
        %vm720 = vmand %vm711, %vm714
        %vm721 = vmand %vm712, %vm715
        %v722 = vsel %vm716, 1, 0
        %v723 = vsel %vm717, 1, 0
        %v724 = vsel %vm718, 1, 0
        %v725 = vsel %vm719, 1, 0
        %v726 = vsel %vm720, 1, 0
        %v727 = vsel %vm721, 1, 0
        %v728 = vcvt.s32.f32 %v722
        %v729 = vcvt.s32.f32 %v723
        %v730 = vcvt.s32.f32 %v724
        %v731 = vcvt.s32.f32 %v725
        %v732 = vcvt.s32.f32 %v726
        %v733 = vcvt.s32.f32 %v727
        %v734 = vld [vmem:[%s286] sm:$0x1]
        %v736 = vperm.slane %v734, 0
        %v738 = vmul.f32 %v728, %v736
        %v739 = vmul.f32 %v729, %v736
        %v740 = vmul.f32 %v730, %v736
        %v741 = vmul.f32 %v731, %v736
        %v742 = vmul.f32 %v732, %v736
        %v743 = vmul.f32 %v733, %v736
        %v744 = vadd.f32 %v539, %v738
        %v745 = vadd.f32 %v542, %v739
        %v746 = vadd.f32 %v545, %v740
        %v747 = vadd.f32 %v548, %v741
        %v748 = vadd.f32 %v551, %v742
        %v749 = vadd.f32 %v554, %v743
        %v750 = vadd.f32 %v557, %v741
        %v751 = vadd.f32 %v560, %v742
        %v752 = vadd.f32 %v563, %v743
        %v753 = vadd.f32 %v566, %v741
        %v754 = vadd.f32 %v569, %v742
        %v755 = vadd.f32 %v572, %v743
        %v756 = vadd.f32 %v575, %v741
        %v757 = vadd.f32 %v578, %v742
        %v758 = vadd.f32 %v581, %v743
        %v759 = vadd.f32 %v584, %v741
        %v760 = vadd.f32 %v587, %v742
        %v761 = vadd.f32 %v590, %v743
        %v762 = vadd.f32 %v593, %v741
        %v763 = vadd.f32 %v596, %v742
        %v764 = vadd.f32 %v599, %v743
        %v765 = vadd.f32 %v602, %v741
        %v766 = vadd.f32 %v605, %v742
        %v767 = vadd.f32 %v608, %v743
        %v768 = vadd.f32 %v611, %v741
        %v769 = vadd.f32 %v614, %v742
        %v770 = vadd.f32 %v617, %v743
        %v771 = vadd.f32 %v620, %v741
        %v772 = vadd.f32 %v623, %v742
        %v773 = vadd.f32 %v626, %v743
        %v774 = vadd.f32 %v629, %v741
        %v775 = vadd.f32 %v632, %v742
        %v776 = vadd.f32 %v635, %v743
        %v777 = vadd.f32 %v638, %v741
        %v778 = vadd.f32 %v641, %v742
        %v779 = vadd.f32 %v644, %v743
        %v780 = vadd.f32 %v647, %v741
        %v781 = vadd.f32 %v650, %v742
        %v782 = vadd.f32 %v653, %v743
        %v783 = vadd.f32 %v656, %v741
        %v784 = vadd.f32 %v659, %v742
        %v785 = vadd.f32 %v662, %v743
        %v786 = vadd.f32 %v665, %v741
        %v787 = vadd.f32 %v668, %v742
        %v788 = vadd.f32 %v671, %v743
        %v789 = vadd.f32 %v674, %v741
        %v790 = vadd.f32 %v677, %v742
        %v791 = vadd.f32 %v680, %v743
        %v792 = vadd.f32 %v683, %v741
        %v793 = vadd.f32 %v686, %v742
        %v794 = vadd.f32 %v689, %v743
        %v795 = vadd.f32 %v692, %v738
        %v796 = vadd.f32 %v695, %v739
        %v797 = vadd.f32 %v698, %v740
        %vm798 = vcmask 64512
        %799 = vst.msk [vmem:[#allocation2] sm:$0xff] %vm798, %v744
        %800 = vst.msk [vmem:[#allocation2 + $0x8] sm:$0xff] %vm798, %v745
        %801 = vst.msk [vmem:[#allocation2 + $0x10] sm:$0xff] %vm798, %v746
        %802 = vst.msk [vmem:[#allocation2 + $0x18] sm:$0xff] %vm798, %v747
        %803 = vst.msk [vmem:[#allocation2 + $0x20] sm:$0xff] %vm798, %v748
        %804 = vst.msk [vmem:[#allocation2 + $0x28] sm:$0xff] %vm798, %v749
        %805 = vst.msk [vmem:[#allocation2 + $0x30] sm:$0xff] %vm798, %v750
        %806 = vst.msk [vmem:[#allocation2 + $0x38] sm:$0xff] %vm798, %v751
        %807 = vst.msk [vmem:[#allocation2 + $0x40] sm:$0xff] %vm798, %v752
        %808 = vst.msk [vmem:[#allocation2 + $0x48] sm:$0xff] %vm798, %v753
        %809 = vst.msk [vmem:[#allocation2 + $0x50] sm:$0xff] %vm798, %v754
        %810 = vst.msk [vmem:[#allocation2 + $0x58] sm:$0xff] %vm798, %v755
        %811 = vst.msk [vmem:[#allocation2 + $0x60] sm:$0xff] %vm798, %v756
        %812 = vst.msk [vmem:[#allocation2 + $0x68] sm:$0xff] %vm798, %v757
        %813 = vst.msk [vmem:[#allocation2 + $0x70] sm:$0xff] %vm798, %v758
        %814 = vst.msk [vmem:[#allocation2 + $0x78] sm:$0xff] %vm798, %v759
        %815 = vst.msk [vmem:[#allocation2 + $0x80] sm:$0xff] %vm798, %v760
        %816 = vst.msk [vmem:[#allocation2 + $0x88] sm:$0xff] %vm798, %v761
        %817 = vst.msk [vmem:[#allocation2 + $0x90] sm:$0xff] %vm798, %v762
        %818 = vst.msk [vmem:[#allocation2 + $0x98] sm:$0xff] %vm798, %v763
        %819 = vst.msk [vmem:[#allocation2 + $0xa0] sm:$0xff] %vm798, %v764
        %820 = vst.msk [vmem:[#allocation2 + $0xa8] sm:$0xff] %vm798, %v765
        %821 = vst.msk [vmem:[#allocation2 + $0xb0] sm:$0xff] %vm798, %v766
        %822 = vst.msk [vmem:[#allocation2 + $0xb8] sm:$0xff] %vm798, %v767
        %823 = vst.msk [vmem:[#allocation2 + $0xc0] sm:$0xff] %vm798, %v768
        %824 = vst.msk [vmem:[#allocation2 + $0xc8] sm:$0xff] %vm798, %v769
        %825 = vst.msk [vmem:[#allocation2 + $0xd0] sm:$0xff] %vm798, %v770
        %826 = vst.msk [vmem:[#allocation2 + $0xd8] sm:$0xff] %vm798, %v771
        %827 = vst.msk [vmem:[#allocation2 + $0xe0] sm:$0xff] %vm798, %v772
        %828 = vst.msk [vmem:[#allocation2 + $0xe8] sm:$0xff] %vm798, %v773
        %829 = vst.msk [vmem:[#allocation2 + $0xf0] sm:$0xff] %vm798, %v774
        %830 = vst.msk [vmem:[#allocation2 + $0xf8] sm:$0xff] %vm798, %v775
        %831 = vst.msk [vmem:[#allocation2 + $0x100] sm:$0xff] %vm798, %v776
        %832 = vst.msk [vmem:[#allocation2 + $0x108] sm:$0xff] %vm798, %v777
        %833 = vst.msk [vmem:[#allocation2 + $0x110] sm:$0xff] %vm798, %v778
        %834 = vst.msk [vmem:[#allocation2 + $0x118] sm:$0xff] %vm798, %v779
        %835 = vst.msk [vmem:[#allocation2 + $0x120] sm:$0xff] %vm798, %v780
        %836 = vst.msk [vmem:[#allocation2 + $0x128] sm:$0xff] %vm798, %v781
        %837 = vst.msk [vmem:[#allocation2 + $0x130] sm:$0xff] %vm798, %v782
        %838 = vst.msk [vmem:[#allocation2 + $0x138] sm:$0xff] %vm798, %v783
        %839 = vst.msk [vmem:[#allocation2 + $0x140] sm:$0xff] %vm798, %v784
        %840 = vst.msk [vmem:[#allocation2 + $0x148] sm:$0xff] %vm798, %v785
        %841 = vst.msk [vmem:[#allocation2 + $0x150] sm:$0xff] %vm798, %v786
        %842 = vst.msk [vmem:[#allocation2 + $0x158] sm:$0xff] %vm798, %v787
        %843 = vst.msk [vmem:[#allocation2 + $0x160] sm:$0xff] %vm798, %v788
        %844 = vst.msk [vmem:[#allocation2 + $0x168] sm:$0xff] %vm798, %v789
        %845 = vst.msk [vmem:[#allocation2 + $0x170] sm:$0xff] %vm798, %v790
        %846 = vst.msk [vmem:[#allocation2 + $0x178] sm:$0xff] %vm798, %v791
        %847 = vst.msk [vmem:[#allocation2 + $0x180] sm:$0xff] %vm798, %v792
        %848 = vst.msk [vmem:[#allocation2 + $0x188] sm:$0xff] %vm798, %v793
        %849 = vst.msk [vmem:[#allocation2 + $0x190] sm:$0xff] %vm798, %v794
        %850 = vst.msk [vmem:[#allocation2 + $0x198] sm:$0xff] %vm798, %v795
        %851 = vst.msk [vmem:[#allocation2 + $0x1a0] sm:$0xff] %vm798, %v796
        %852 = vst.msk [vmem:[#allocation2 + $0x1a8] sm:$0xff] %vm798, %v797
        %v853 = vld [vmem:[%s290] sm:$0xff]
        %v854 = vld [vmem:[%s290 + $0x8] sm:$0x1]
        %v855 = vld [vmem:[%s293] sm:$0x1]
        loop: start=0, step=1, limit=8
        $region41: #{tpu_custom_call.1} parent=39 // loop_pre_header
          _
        $region42: #{tpu_custom_call.1} parent=39 // loop_header
          %s857 = sphi 0, %s861
          %p858 = scmp.ge.s32.totalorder %s857, 8
        $region43: #{tpu_custom_call.1} parent=39 // loop_header_branch
          %860 = sbr.rel (%p858) target = $region47
        $region44: #{tpu_custom_call.1} parent=39 // loop_body
          %s862 = smul.u32 %s857, 2
          %s863 = smul.u32 %s862, 24
          %s864 = scalar_lea.vmem [#allocation2], %s863
          %v865 = vld [vmem:[%s864] ss:$2 sm:$0xff]
          %v866 = vperm.slane %v853, 0
          %v867 = vmul.f32 %v865, %v866
          %v868 = vadd.f32 %v867, 0.0
          %s869 = scalar_lea.vmem %s864, 1 [#allocation2]
          %v870 = vld [vmem:[%s869] ss:$2 sm:$0xff]
          %v871 = vperm.slane %v853, 1
          %v872 = vmul.f32 %v870, %v871
          %v873 = vadd.f32 %v868, %v872
          %s874 = scalar_lea.vmem %s864, 2 [#allocation2]
          %v875 = vld [vmem:[%s874] ss:$2 sm:$0xff]
          %v876 = vperm.slane %v853, 2
          %v877 = vmul.f32 %v875, %v876
          %v878 = vadd.f32 %v873, %v877
          %s879 = sadd.s32 %s862, 1
          %s880 = smul.u32 %s879, 24
          %s881 = scalar_lea.vmem [#allocation2], %s880
          %v882 = vld [vmem:[%s881] ss:$2 sm:$0xff]
          %v883 = vperm.slane %v853, 3
          %v884 = vmul.f32 %v882, %v883
          %v885 = vadd.f32 %v878, %v884
          %s886 = scalar_lea.vmem %s881, 1 [#allocation2]
          %v887 = vld [vmem:[%s886] ss:$2 sm:$0xff]
          %v888 = vperm.slane %v853, 4
          %v889 = vmul.f32 %v887, %v888
          %v890 = vadd.f32 %v885, %v889
          %s891 = scalar_lea.vmem %s881, 2 [#allocation2]
          %v892 = vld [vmem:[%s891] ss:$2 sm:$0xff]
          %v893 = vperm.slane %v853, 5
          %v894 = vmul.f32 %v892, %v893
          %v895 = vadd.f32 %v890, %v894
          %s896 = sadd.s32 %s862, 2
          %s897 = smul.u32 %s896, 24
          %s898 = scalar_lea.vmem [#allocation2], %s897
          %v899 = vld [vmem:[%s898] ss:$2 sm:$0xff]
          %v900 = vperm.slane %v853, 6
          %v901 = vmul.f32 %v899, %v900
          %v902 = vadd.f32 %v895, %v901
          %s903 = scalar_lea.vmem %s898, 1 [#allocation2]
          %v904 = vld [vmem:[%s903] ss:$2 sm:$0xff]
          %v905 = vperm.slane %v853, 7
          %v906 = vmul.f32 %v904, %v905
          %v907 = vadd.f32 %v902, %v906
          %s908 = scalar_lea.vmem %s898, 2 [#allocation2]
          %v909 = vld [vmem:[%s908] ss:$2 sm:$0xff]
          %v910 = vperm.slane %v854, 0
          %v911 = vmul.f32 %v909, %v910
          %v912 = vadd.f32 %v907, %v911
          %v914 = vperm.slane %v855, 0
          %v916 = vadd.f32 %v912, %v914
          %s917 = smul.u32 %s857, 8
          %s918 = scalar_lea.vmem %s279, %s917 [#allocation3]
          %919 = vst.msk [vmem:[%s918] sm:$0xff] %vm798, %v916
        $region45: #{tpu_custom_call.1} parent=39 // loop_footer
          %s861 = sadd.s32 1, %s857
        $region46: #{tpu_custom_call.1} parent=39 // loop_footer_branch
          %856 = sbr.rel target = $region42
        $region47: #{tpu_custom_call.1} parent=39 // loop_exit
          _
        %s920 = sand.u32 %s171, 1
        %s921 = scalar_lea.sflag [#allocation4], %s920
        %s922 = sand.u32 %s171, 1
        %s923 = smul.addr %s922, 64
        %s924 = scalar_lea.vmem [#allocation3], %s923
        // Predicated region
        $region48: #{tpu_custom_call.1} parent=39 // pred_check
          %p925 = pneg %p181
        $region49: #{tpu_custom_call.1} parent=39 // pred_check_branch
          %927 = sbr.rel (%p925) target = $region51
        $region50: #{tpu_custom_call.1} parent=39 // pred_region
          %929 = vsyncadd %s921, 0
          %s930 = smul.addr %s23, 8
          %s931 = sadd.s32 %s24, %s930
          %s932 = smul.addr %s931, 8
          %s933 = scalar_lea.hbm %s5, %s932
          %s934 = sshll.u32 %s924, 4
          %s935 = int_to_ptr.vmem [resolvable:$true] %s934
          %s936 = sshll.u32 %s933, 4
          %s937 = int_to_ptr.hbm [resolvable:$true] %s936
          %942 = dma.vmem_to_hbm [thread:$0]  %s935, 1024, %s937, %s921, 128, 128, 8
        $region51: #{tpu_custom_call.1} parent=39 // pred_fallthru
          _
      $region40: #{tpu_custom_call.1} parent=5 // pred_fallthru
        _
      %p943 = scmp.le.s32.totalorder 2, %s14
      // Predicated region
      $region52: #{tpu_custom_call.1} parent=5 // pred_check
        %p944 = pneg %p943
      $region53: #{tpu_custom_call.1} parent=5 // pred_check_branch
        %946 = sbr.rel (%p944) target = $region55
      $region54: #{tpu_custom_call.1} parent=5 // pred_region
        %s947 = ssub.s32 %s14, 2
        // Predicated region
        $region56: #{tpu_custom_call.1} parent=54 // pred_check
          %p948 = pneg %p187
        $region57: #{tpu_custom_call.1} parent=54 // pred_check_branch
          %950 = sbr.rel (%p948) target = $region59
        $region58: #{tpu_custom_call.1} parent=54 // pred_region
          %s951 = sand.u32 %s172, 1
          %s952 = scalar_lea.sflag [#allocation4], %s951
          %s953 = sand.u32 %s172, 1
          %s954 = smul.addr %s953, 64
          %s955 = scalar_lea.vmem [#allocation3], %s954
          %957 = dma.done %s952, 1024
        $region59: #{tpu_custom_call.1} parent=54 // pred_fallthru
          _
      $region55: #{tpu_custom_call.1} parent=5 // pred_fallthru
        _
    $region6: #{tpu_custom_call.1} parent=1 // loop_footer
      %s18 = sadd.s32 1, %s14
    $region7: #{tpu_custom_call.1} parent=1 // loop_footer_branch
      %13 = sbr.rel target = $region3
    $region8: #{tpu_custom_call.1} parent=1 // loop_exit
      _
    %958 = vsyncpa [#allocation4], 1
    %s959 = scalar_lea.sflag [#allocation4], 1
    %960 = vsyncpa %s959, 1

</llo_original>
